<compile_context>
chip_gen: v7x
topology: tpu7x:2x2x1
jax: 0.10.0
libtpu: 0.0.40
codegen_flags: <defaults>
</compile_context>

<pallas_src>
import jax
import jax.numpy as jnp
from jax.experimental import pallas as pl
from jax.experimental.pallas import tpu as pltpu

_BUF_BYTES = 4 * 1024 * 1024     # per-buffer tile target (~4 MiB)
_LANE_CAP = 4096                 # max lane width for the flattened layout


def _glu_kernel(a_ref, b_ref, o_ref):
    # a_ref, b_ref: (BN, 1, TR, TCOL) blocks of the two halves; o_ref: (BN, TR, TCOL).
    a = a_ref[:, 0, :, :].astype(jnp.float32)
    b = b_ref[:, 0, :, :].astype(jnp.float32)
    # sigmoid(b) == 0.5 * (tanh(0.5 * b) + 1): single EUP transcendental, no divide.
    gate = 0.5 * (jnp.tanh(0.5 * b) + 1.0)
    o_ref[...] = (a * gate).astype(o_ref.dtype)


def _sublane(dtype):
    return {4: 8, 2: 16, 1: 32}.get(jnp.dtype(dtype).itemsize, 8)


def _pick_lane(length):
    """Largest multiple of 128 dividing `length` (capped at _LANE_CAP), preferring
    widths that leave >= 8 rows so vreg sublanes stay filled.  Returns None when
    `length` is not a multiple of 128 (caller falls back to the (nc, hw) layout)."""
    if length % 128 != 0:
        return None
    best_tall = None
    c = 128
    while c <= min(length, _LANE_CAP):
        if length % c == 0 and length // c >= 8:
            best_tall = c
        c += 128
    # length < 1024: no lane width leaves 8 rows; 128 maximizes sublane fill.
    return best_tall if best_tall is not None else 128


def _plan(n, nc, hw, dtype):
    itemsize = jnp.dtype(dtype).itemsize
    sub = _sublane(dtype)

    lane = _pick_lane(nc * hw)
    if lane is not None:
        # Lane-dense path: each half is a contiguous length-(nc*hw) vector per
        # batch; view it as (rows, lane) with lane a multiple of 128.
        rows, cols = (nc * hw) // lane, lane
        tcol = cols                       # full lane extent -> contiguous DMA slabs
    else:
        # nc*hw not 128-aligned: keep (nc, hw).  Tile hw with a 128-multiple block
        # when it's large (only the edge block is masked); otherwise full extent.
        rows, cols = nc, hw
        tcol = cols if cols <= _LANE_CAP else _LANE_CAP

    row_bytes = tcol * itemsize
    if rows * row_bytes <= _BUF_BYTES or rows <= sub:
        tr = rows                         # full extent: always a legal block dim
    else:
        tr = max(sub, (_BUF_BYTES // row_bytes) // sub * sub)

    # Fold several batch elements per grid step when one step would otherwise
    # move only a small slab (amortizes the fixed per-step cost), but keep
    # >= 2 total grid steps so v7x can shard the grid across both TensorCores.
    bn = 1
    if tr == rows and tcol == cols and n > 1:
        block_bytes = tr * tcol * itemsize
        for cand in range(2, n // 2 + 1):
            if n % cand == 0 and cand * block_bytes <= _BUF_BYTES:
                bn = cand

    # 2 inputs + 1 output, double-buffered.  40 MiB covers the 4 MiB/buffer
    # target on every generation (> v5e's 16 MiB default, < v7x's 64 MiB
    # physical); degenerate unaligned shapes may push it higher (clamped).
    footprint = 6 * bn * tr * tcol * itemsize
    vmem_limit = min(64 * 1024 * 1024, max(40 * 1024 * 1024, footprint + (8 << 20)))
    return rows, cols, bn, tr, tcol, vmem_limit


def glu(x):
    """x: (N, C, H, W) -> (N, C//2, H, W); out = x[:, :C//2] * sigmoid(x[:, C//2:])."""
    n, c, h, w = x.shape
    assert c % 2 == 0, "channels dont divide 2!"
    nc = c // 2
    hw = h * w

    rows, cols, bn, tr, tcol, vmem_limit = _plan(n, nc, hw, x.dtype)

    # Free (order-preserving) reshape: the two GLU halves become an explicit
    # axis of size 2; each half's per-batch data is laid out as (rows, cols).
    x4 = x.reshape(n, 2, rows, cols)
    grid = (n // bn, pl.cdiv(rows, tr), pl.cdiv(cols, tcol))

    a_spec = pl.BlockSpec((bn, 1, tr, tcol), lambda i, j, k: (i, 0, j, k))
    b_spec = pl.BlockSpec((bn, 1, tr, tcol), lambda i, j, k: (i, 1, j, k))
    o_spec = pl.BlockSpec((bn, tr, tcol), lambda i, j, k: (i, j, k))

    out = pl.pallas_call(
        _glu_kernel,
        out_shape=jax.ShapeDtypeStruct((n, rows, cols), x.dtype),
        grid=grid,
        in_specs=[a_spec, b_spec],
        out_specs=o_spec,
        compiler_params=pltpu.CompilerParams(
            dimension_semantics=("parallel", "parallel", "parallel"),
            vmem_limit_bytes=vmem_limit,
        ),
    )(x4, x4)
    return out.reshape(n, nc, h, w)


if __name__ == "__main__":
    key = jax.random.PRNGKey(0)
    # small shapes consistent with the module: batch=2, channels=4, spatial=16
    x = jax.random.normal(key, (2, 4, 16, 16), dtype=jnp.float32)

    y = glu(x)
    jax.block_until_ready(y)

    # reference check in plain JAX (tolerance covers tanh- vs exp-based sigmoid)
    nc = x.shape[1] // 2
    ref = x[:, :nc] * jax.nn.sigmoid(x[:, nc:])
    assert y.shape == ref.shape
    assert jnp.allclose(y, ref, atol=1e-5, rtol=1e-5)

    print("KERNEL_OK")
</pallas_src>

<mosaic_0001>
module attributes {stable_mosaic.version = 11 : i64} {
  func.func @_glu_kernel(%arg0: i32, %arg1: i32, %arg2: i32, %arg3: memref<1x1x4x128xf32, #tpu.memory_space<vmem>>, %arg4: memref<1x1x4x128xf32, #tpu.memory_space<vmem>>, %arg5: memref<1x4x128xf32, #tpu.memory_space<vmem>>) attributes {dimension_semantics = [#tpu.dimension_semantics<parallel>, #tpu.dimension_semantics<parallel>, #tpu.dimension_semantics<parallel>], iteration_bounds = array<i64: 2, 1, 1>, scalar_prefetch = 0 : i64, scratch_operands = 0 : i64, tpu.core_type = #tpu.core_type<tc>, window_params = [{transform_indices = @transform_0, window_bounds = array<i64: 1, 1, 4, 128>}, {transform_indices = @transform_1, window_bounds = array<i64: 1, 1, 4, 128>}, {transform_indices = @transform_2, window_bounds = array<i64: 1, 4, 128>}]} {
    %c0 = arith.constant 0 : index
    %c0_0 = arith.constant 0 : index
    %c0_1 = arith.constant 0 : index
    %c0_2 = arith.constant 0 : index
    %0 = vector.load %arg3[%c0, %c0_0, %c0_1, %c0_2] : memref<1x1x4x128xf32, #tpu.memory_space<vmem>>, vector<1x1x4x128xf32>
    %1 = vector.shape_cast %0 : vector<1x1x4x128xf32> to vector<1x4x128xf32>
    %c0_3 = arith.constant 0 : index
    %c0_4 = arith.constant 0 : index
    %c0_5 = arith.constant 0 : index
    %c0_6 = arith.constant 0 : index
    %2 = vector.load %arg4[%c0_3, %c0_4, %c0_5, %c0_6] : memref<1x1x4x128xf32, #tpu.memory_space<vmem>>, vector<1x1x4x128xf32>
    %3 = vector.shape_cast %2 : vector<1x1x4x128xf32> to vector<1x4x128xf32>
    %cst = arith.constant 5.000000e-01 : f32
    %4 = vector.broadcast %cst : f32 to vector<1x4x128xf32>
    %5 = arith.mulf %4, %3 : vector<1x4x128xf32>
    %6 = math.tanh %5 : vector<1x4x128xf32>
    %cst_7 = arith.constant 1.000000e+00 : f32
    %7 = vector.broadcast %cst_7 : f32 to vector<1x4x128xf32>
    %8 = arith.addf %6, %7 : vector<1x4x128xf32>
    %cst_8 = arith.constant 5.000000e-01 : f32
    %9 = vector.broadcast %cst_8 : f32 to vector<1x4x128xf32>
    %10 = arith.mulf %9, %8 : vector<1x4x128xf32>
    %11 = arith.mulf %1, %10 : vector<1x4x128xf32>
    %c0_9 = arith.constant 0 : index
    %c0_10 = arith.constant 0 : index
    %c0_11 = arith.constant 0 : index
    %12 = vector.load %arg5[%c0_9, %c0_10, %c0_11] : memref<1x4x128xf32, #tpu.memory_space<vmem>>, vector<1x4x128xf32>
    tpu.vector_store %arg5[%c0_9, %c0_10, %c0_11], %11 {strides = array<i32>} : memref<1x4x128xf32, #tpu.memory_space<vmem>>, vector<1x4x128xf32>,
    return
  }
  func.func @transform_0(%arg0: i32, %arg1: i32, %arg2: i32) -> (i32, i32, i32, i32) {
    %c0_i32 = arith.constant 0 : i32
    %c0_i32_0 = arith.constant 0 : i32
    return %arg0, %c0_i32, %arg1, %arg2 : i32, i32, i32, i32
  }
  func.func @transform_1(%arg0: i32, %arg1: i32, %arg2: i32) -> (i32, i32, i32, i32) {
    %c1_i32 = arith.constant 1 : i32
    %c0_i32 = arith.constant 0 : i32
    return %arg0, %c1_i32, %arg1, %arg2 : i32, i32, i32, i32
  }
  func.func @transform_2(%arg0: i32, %arg1: i32, %arg2: i32) -> (i32, i32, i32) {
    %c0_i32 = arith.constant 0 : i32
    return %arg0, %arg1, %arg2 : i32, i32, i32
  }
}

</mosaic_0001>

<llo_original>
// kernel: tpu_custom_call.1
$region0: #{tpu_custom_call.1}
  #allocation0 [shape = 'u32[]', space=smem, size = 0x4, offset = 0x4, fixed_abs, tag = 'smem constant byte address 0x4 - core index']
  #allocation1 [shape = 'u32[144,128]{1,0:T(1,128)}', space=vmem, size = 0x12000, scoped, tag = 'internal scratch']
  %s0 = inlined_call_operand.hbm [shape: f32[2,2,4,128], index: 0, kind: input, shape index: {}]
  %s1 = inlined_call_operand.hbm [shape: f32[2,2,4,128], index: 1, kind: input, shape index: {}]
  %s2 = inlined_call_operand.hbm [shape: f32[2,4,128], index: 2, kind: output, shape index: {}]
  %s3 = sld [smem:[#allocation0]]
  $region49: #{tpu_custom_call.1} parent=0
    _
  %s5 = ssub.s32 1, %s3
  %s6 = scalar_select 0, %s5, %s3
  $region1: #{tpu_custom_call.1} parent=0
    #allocation2 [shape = 'u8[4096]{0}', space=vmem, size = 0x1000, scoped, tag = 'input window, operand 0']
    #allocation3 [shape = 's32[2]{0}', space=sflag, size = 0x8, scoped, tag = 'scoped memory for tpu_custom_call.1']
    #allocation4 [shape = 's32[2]{0}', space=sflag, size = 0x8, scoped, tag = 'scoped memory for tpu_custom_call.1']
    #allocation5 [shape = 'u8[4096]{0}', space=vmem, size = 0x1000, scoped, tag = 'input window, operand 1']
    #allocation6 [shape = 's32[2]{0}', space=sflag, size = 0x8, scoped, tag = 'scoped memory for tpu_custom_call.1']
    #allocation7 [shape = 'u8[4096]{0}', space=vmem, size = 0x1000, scoped, tag = 'output window, operand 0']
    %7 = vsyncpa [#allocation3], 0
    %s8 = scalar_lea.sflag [#allocation3], 1
    %9 = vsyncpa %s8, 0
    %10 = vsyncpa [#allocation6], 0
    %s11 = scalar_lea.sflag [#allocation6], 1
    %12 = vsyncpa %s11, 0
    %13 = vsyncpa [#allocation4], 0
    %s14 = scalar_lea.sflag [#allocation4], 1
    %15 = vsyncpa %s14, 0
    loop: start=0, step=1, limit=4
    $region2: #{tpu_custom_call.1} parent=1 // loop_pre_header
      _
    $region3: #{tpu_custom_call.1} parent=1 // loop_header
      %s17 = sphi 0, %s21
      %p18 = scmp.ge.s32.totalorder %s17, 4
      %s24 = sphi 0, %s43
      %s25 = sphi 0, %s39
      %s26 = sphi 0, %s35
      %s27 = sphi 0, %s24
      %s28 = sphi 0, %s25
      %s29 = sphi 0, %s26
      %s30 = sphi 0, %s27
      %s31 = sphi 0, %s28
      %s32 = sphi 0, %s29
      %s50 = sphi 0, %s52
      %s53 = sphi 0, %s50
      %s54 = sphi 0, %s53
      %s70 = sphi 0, %s54
      %s80 = sphi 0, %s82
      %s83 = sphi 0, %s80
      %s84 = sphi 0, %s83
      %s100 = sphi 0, %s84
      %s110 = sphi 0, %s112
      %s113 = sphi 0, %s110
      %s114 = sphi 0, %s113
      %s130 = sphi 0, %s114
    $region4: #{tpu_custom_call.1} parent=1 // loop_header_branch
      %20 = sbr.rel (%p18) target = $region8
    $region5: #{tpu_custom_call.1} parent=1 // loop_body
      %s22 = ssub.s32 %s17, 1
      %s23 = ssub.s32 %s17, 2
      %s33 = sadd.s32 1, %s26
      %p34 = scmp.ge.s32.totalorder %s33, 1
      %s35 = scalar_select %p34, 0, %s33
      %s36 = sadd.s32 1, %s25
      %s37 = scalar_select %p34, %s36, %s25
      %p38 = scmp.ge.s32.totalorder %s37, 1
      %s39 = scalar_select %p38, 0, %s37
      %s40 = sadd.s32 1, %s24
      %s41 = scalar_select %p38, %s40, %s24
      %p42 = scmp.ge.s32.totalorder %s41, 2
      %s43 = scalar_select %p42, 0, %s41
      %s44 = ssub.s32 %s24, %s43
      %s45 = ssub.s32 %s25, %s39
      %s46 = sor.u32 %s44, %s45
      %s47 = ssub.s32 %s26, %s35
      %s48 = sor.u32 %s46, %s47
      %p49 = scmp.eq.s32.totalorder %s48, 0
      %s51 = sadd.s32 %s50, 1
      %s52 = scalar_select %p49, %s50, %s51
      %p55 = pneg %p49
      %p56 = scmp.eq.s32.totalorder %s17, 1
      %p57 = por %p55, %p56
      %p58 = scmp.ne.s32.totalorder %s50, %s53
      %p59 = scmp.eq.s32.totalorder %s17, 0
      %p60 = por %p58, %p59
      %p61 = scmp.ne.s32.totalorder %s50, %s53
      %p62 = scmp.eq.s32.totalorder %s22, 1
      %p63 = por %p61, %p62
      %p64 = scmp.ne.s32.totalorder %s53, %s54
      %p65 = scmp.eq.s32.totalorder %s22, 0
      %p66 = por %p64, %p65
      %p67 = scmp.ne.s32.totalorder %s53, %s54
      %p68 = scmp.eq.s32.totalorder %s23, 1
      %p69 = por %p67, %p68
      %p71 = scmp.ne.s32.totalorder %s54, %s70
      %p72 = scmp.eq.s32.totalorder %s23, 0
      %p73 = por %p71, %p72
      %s74 = ssub.s32 %s24, %s43
      %s75 = ssub.s32 %s25, %s39
      %s76 = sor.u32 %s74, %s75
      %s77 = ssub.s32 %s26, %s35
      %s78 = sor.u32 %s76, %s77
      %p79 = scmp.eq.s32.totalorder %s78, 0
      %s81 = sadd.s32 %s80, 1
      %s82 = scalar_select %p79, %s80, %s81
      %p85 = pneg %p79
      %p86 = scmp.eq.s32.totalorder %s17, 1
      %p87 = por %p85, %p86
      %p88 = scmp.ne.s32.totalorder %s80, %s83
      %p89 = scmp.eq.s32.totalorder %s17, 0
      %p90 = por %p88, %p89
      %p91 = scmp.ne.s32.totalorder %s80, %s83
      %p92 = scmp.eq.s32.totalorder %s22, 1
      %p93 = por %p91, %p92
      %p94 = scmp.ne.s32.totalorder %s83, %s84
      %p95 = scmp.eq.s32.totalorder %s22, 0
      %p96 = por %p94, %p95
      %p97 = scmp.ne.s32.totalorder %s83, %s84
      %p98 = scmp.eq.s32.totalorder %s23, 1
      %p99 = por %p97, %p98
      %p101 = scmp.ne.s32.totalorder %s84, %s100
      %p102 = scmp.eq.s32.totalorder %s23, 0
      %p103 = por %p101, %p102
      %s104 = ssub.s32 %s24, %s43
      %s105 = ssub.s32 %s25, %s39
      %s106 = sor.u32 %s104, %s105
      %s107 = ssub.s32 %s26, %s35
      %s108 = sor.u32 %s106, %s107
      %p109 = scmp.eq.s32.totalorder %s108, 0
      %s111 = sadd.s32 %s110, 1
      %s112 = scalar_select %p109, %s110, %s111
      %p115 = pneg %p109
      %p116 = scmp.eq.s32.totalorder %s17, 1
      %p117 = por %p115, %p116
      %p118 = scmp.ne.s32.totalorder %s110, %s113
      %p119 = scmp.eq.s32.totalorder %s17, 0
      %p120 = por %p118, %p119
      %p121 = scmp.ne.s32.totalorder %s110, %s113
      %p122 = scmp.eq.s32.totalorder %s22, 1
      %p123 = por %p121, %p122
      %p124 = scmp.ne.s32.totalorder %s113, %s114
      %p125 = scmp.eq.s32.totalorder %s22, 0
      %p126 = por %p124, %p125
      %p127 = scmp.ne.s32.totalorder %s113, %s114
      %p128 = scmp.eq.s32.totalorder %s23, 1
      %p129 = por %p127, %p128
      %p131 = scmp.ne.s32.totalorder %s114, %s130
      %p132 = scmp.eq.s32.totalorder %s23, 0
      %p133 = por %p131, %p132
      %p134 = scmp.le.s32.totalorder 1, %s17
      %p135 = scmp.lt.s32.totalorder %s17, 3
      %p136 = pnand %p134, %p135
      %p137 = pneg %p136
      // Predicated region
      $region9: #{tpu_custom_call.1} parent=5 // pred_check
        _
      $region10: #{tpu_custom_call.1} parent=5 // pred_check_branch
        %139 = sbr.rel (%p136) target = $region12
      $region11: #{tpu_custom_call.1} parent=5 // pred_region
        %s140 = ssub.s32 %s17, 1
      $region12: #{tpu_custom_call.1} parent=5 // pred_fallthru
        _
      %p141 = scmp.lt.s32.totalorder %s17, 2
      // Predicated region
      $region13: #{tpu_custom_call.1} parent=5 // pred_check
        %p142 = pneg %p141
      $region14: #{tpu_custom_call.1} parent=5 // pred_check_branch
        %144 = sbr.rel (%p142) target = $region16
      $region15: #{tpu_custom_call.1} parent=5 // pred_region
        // Predicated region
        $region17: #{tpu_custom_call.1} parent=15 // pred_check
          %p145 = pneg %p60
        $region18: #{tpu_custom_call.1} parent=15 // pred_check_branch
          %147 = sbr.rel (%p145) target = $region20
        $region19: #{tpu_custom_call.1} parent=15 // pred_region
          %s148 = sand.u32 %s50, 1
          %s149 = scalar_lea.sflag [#allocation3], %s148
          %s150 = sand.u32 %s50, 1
          %s151 = smul.addr %s150, 4
          %s152 = scalar_lea.vmem [#allocation2], %s151
          %s154 = ssub.s32 64, 64
          %155 = vsyncadd %s149, %s154
          %s156 = sadd.s32 %s26, %s25
          %s157 = smul.addr %s24, 2
          %s158 = sadd.s32 %s156, %s157
          %s159 = smul.addr %s158, 64
          %s160 = scalar_lea.hbm %s0, %s159
          %s162 = sshll.u32 %s152, 4
          %s163 = int_to_ptr.vmem [resolvable:$true] %s162
          %165 = dma.hbm_to_vmem [thread:$0]  %s160, 64, %s163, %s149
        $region20: #{tpu_custom_call.1} parent=15 // pred_fallthru
          _
        // Predicated region
        $region21: #{tpu_custom_call.1} parent=15 // pred_check
          %p166 = pneg %p90
        $region22: #{tpu_custom_call.1} parent=15 // pred_check_branch
          %168 = sbr.rel (%p166) target = $region24
        $region23: #{tpu_custom_call.1} parent=15 // pred_region
          %s169 = sand.u32 %s80, 1
          %s170 = scalar_lea.sflag [#allocation6], %s169
          %s171 = sand.u32 %s80, 1
          %s172 = smul.addr %s171, 4
          %s173 = scalar_lea.vmem [#allocation5], %s172
          %s175 = ssub.s32 64, 64
          %176 = vsyncadd %s170, %s175
          %s177 = sadd.s32 %s26, %s25
          %s178 = sadd.s32 %s177, 1
          %s179 = smul.addr %s24, 2
          %s180 = sadd.s32 %s178, %s179
          %s181 = smul.addr %s180, 64
          %s182 = scalar_lea.hbm %s1, %s181
          %s184 = sshll.u32 %s173, 4
          %s185 = int_to_ptr.vmem [resolvable:$true] %s184
          %187 = dma.hbm_to_vmem [thread:$0]  %s182, 64, %s185, %s170
        $region24: #{tpu_custom_call.1} parent=15 // pred_fallthru
          _
      $region16: #{tpu_custom_call.1} parent=5 // pred_fallthru
        _
      %p188 = scmp.le.s32.totalorder 1, %s17
      %p189 = scmp.lt.s32.totalorder %s17, 3
      %p190 = pnand %p188, %p189
      %p191 = pneg %p190
      // Predicated region
      $region25: #{tpu_custom_call.1} parent=5 // pred_check
        _
      $region26: #{tpu_custom_call.1} parent=5 // pred_check_branch
        %193 = sbr.rel (%p190) target = $region28
      $region27: #{tpu_custom_call.1} parent=5 // pred_region
        %s194 = ssub.s32 %s17, 1
        %s195 = sand.u32 %s53, 1
        %s196 = scalar_lea.sflag [#allocation3], %s195
        %s197 = sand.u32 %s53, 1
        %s198 = smul.addr %s197, 4
        %s199 = scalar_lea.vmem [#allocation2], %s198
        // Predicated region
        $region29: #{tpu_custom_call.1} parent=27 // pred_check
          %p200 = pneg %p66
        $region30: #{tpu_custom_call.1} parent=27 // pred_check_branch
          %202 = sbr.rel (%p200) target = $region32
        $region31: #{tpu_custom_call.1} parent=27 // pred_region
          %203 = dma.done %s196, 64
        $region32: #{tpu_custom_call.1} parent=27 // pred_fallthru
          _
        %s204 = sand.u32 %s83, 1
        %s205 = scalar_lea.sflag [#allocation6], %s204
        %s206 = sand.u32 %s83, 1
        %s207 = smul.addr %s206, 4
        %s208 = scalar_lea.vmem [#allocation5], %s207
        // Predicated region
        $region33: #{tpu_custom_call.1} parent=27 // pred_check
          %p209 = pneg %p96
        $region34: #{tpu_custom_call.1} parent=27 // pred_check_branch
          %211 = sbr.rel (%p209) target = $region36
        $region35: #{tpu_custom_call.1} parent=27 // pred_region
          %212 = dma.done %s205, 64
        $region36: #{tpu_custom_call.1} parent=27 // pred_fallthru
          _
        %s213 = sand.u32 %s53, 1
        %s214 = scalar_lea.sflag [#allocation3], %s213
        %s215 = sand.u32 %s53, 1
        %s216 = smul.addr %s215, 4
        %s217 = scalar_lea.vmem [#allocation2], %s216
        %p218 = pneg %p66
        %p219 = pneg %p63
        %s220 = sand.u32 %s83, 1
        %s221 = scalar_lea.sflag [#allocation6], %s220
        %s222 = sand.u32 %s83, 1
        %s223 = smul.addr %s222, 4
        %s224 = scalar_lea.vmem [#allocation5], %s223
        %p225 = pneg %p96
        %p226 = pneg %p93
        %p227 = pneg %p126
        %p228 = pneg %p123
        %s229 = sand.u32 %s113, 1
        %s230 = scalar_lea.sflag [#allocation4], %s229
        %s231 = sand.u32 %s113, 1
        %s232 = smul.addr %s231, 4
        %s233 = scalar_lea.vmem [#allocation7], %s232
        %v234 = vld [vmem:[%s199] sm:$0xf]
        %v235 = vld [vmem:[%s208] sm:$0xf]
        %v236 = vmul.f32 %v235, 0.5
        %v237 = vtanh.pop %v236
        %v238 = vadd.f32 %v237, 1.0
        %v239 = vmul.f32 %v238, 0.5
        %v240 = vmul.f32 %v234, %v239
        %241 = vst [vmem:[%s233] sm:$0xf] %v240
        %s242 = sand.u32 %s113, 1
        %s243 = scalar_lea.sflag [#allocation4], %s242
        %s244 = sand.u32 %s113, 1
        %s245 = smul.addr %s244, 4
        %s246 = scalar_lea.vmem [#allocation7], %s245
        // Predicated region
        $region37: #{tpu_custom_call.1} parent=27 // pred_check
          %p247 = pneg %p123
        $region38: #{tpu_custom_call.1} parent=27 // pred_check_branch
          %249 = sbr.rel (%p247) target = $region40
        $region39: #{tpu_custom_call.1} parent=27 // pred_region
          %s251 = ssub.s32 64, 64
          %252 = vsyncadd %s243, %s251
          %s253 = sadd.s32 %s29, %s28
          %s254 = sadd.s32 %s253, %s27
          %s255 = smul.addr %s254, 64
          %s256 = scalar_lea.hbm %s2, %s255
          %s258 = sshll.u32 %s246, 4
          %s259 = int_to_ptr.vmem [resolvable:$true] %s258
          %261 = dma.vmem_to_hbm [thread:$0]  %s259, 64, %s256, %s243
        $region40: #{tpu_custom_call.1} parent=27 // pred_fallthru
          _
      $region28: #{tpu_custom_call.1} parent=5 // pred_fallthru
        _
      %p262 = scmp.le.s32.totalorder 2, %s17
      // Predicated region
      $region41: #{tpu_custom_call.1} parent=5 // pred_check
        %p263 = pneg %p262
      $region42: #{tpu_custom_call.1} parent=5 // pred_check_branch
        %265 = sbr.rel (%p263) target = $region44
      $region43: #{tpu_custom_call.1} parent=5 // pred_region
        %s266 = ssub.s32 %s17, 2
        // Predicated region
        $region45: #{tpu_custom_call.1} parent=43 // pred_check
          %p267 = pneg %p129
        $region46: #{tpu_custom_call.1} parent=43 // pred_check_branch
          %269 = sbr.rel (%p267) target = $region48
        $region47: #{tpu_custom_call.1} parent=43 // pred_region
          %s270 = sand.u32 %s114, 1
          %s271 = scalar_lea.sflag [#allocation4], %s270
          %s272 = sand.u32 %s114, 1
          %s273 = smul.addr %s272, 4
          %s274 = scalar_lea.vmem [#allocation7], %s273
          %275 = dma.done %s271, 64
        $region48: #{tpu_custom_call.1} parent=43 // pred_fallthru
          _
      $region44: #{tpu_custom_call.1} parent=5 // pred_fallthru
        _
    $region6: #{tpu_custom_call.1} parent=1 // loop_footer
      %s21 = sadd.s32 1, %s17
    $region7: #{tpu_custom_call.1} parent=1 // loop_footer_branch
      %16 = sbr.rel target = $region3
    $region8: #{tpu_custom_call.1} parent=1 // loop_exit
      _
    %276 = vsyncpa [#allocation3], 1
    %s277 = scalar_lea.sflag [#allocation3], 1
    %278 = vsyncpa %s277, 1
    %279 = vsyncpa [#allocation6], 1
    %s280 = scalar_lea.sflag [#allocation6], 1
    %281 = vsyncpa %s280, 1
    %282 = vsyncpa [#allocation4], 1
    %s283 = scalar_lea.sflag [#allocation4], 1
    %284 = vsyncpa %s283, 1

</llo_original>
